<compile_context>
chip_gen: v7x
topology: tpu7x:2x2x1
jax: 0.10.0
libtpu: 0.0.40
codegen_flags: <defaults>
</compile_context>

<pallas_src>
import functools

import jax
import jax.numpy as jnp
from jax import lax
from jax.experimental import pallas as pl
from jax.experimental.pallas import tpu as pltpu


def _body_conv_kernel(x_ref, w_ref, shift_ref, o_ref, halo_ref, *,
                      tap_offsets, pad_l, compute_dtype):
    """One grid step = Bt batch elements (channels-last).

    x_ref    : (Bt, L, C)  f32 input block (also the residual)                 (VMEM)
    w_ref    : (Kact, C, C) BN-folded per-tap weights, compute_dtype           (VMEM)
    shift_ref: (1, C)      BN-folded bias/shift, f32                           (VMEM)
    o_ref    : (Bt, L, C)  output block (lane-dense stores, C = 128)
    halo_ref : (Bt, L + pad_total, C) f32 scratch holding the 'same'-padded block
    """
    Bt, L, C = x_ref.shape
    H = halo_ref.shape[1]                                   # L + pad_total

    x = x_ref[...]                                          # (Bt, L, C) f32, residual source

    # Build the zero-padded halo once per block.  The halo stays f32 so every sublane-offset
    # slice below uses the plain 32-bit layout (cheap, well-supported shifted loads); the
    # operand cast to compute_dtype happens per tap and its VPU cost hides under the HBM DMA
    # (the op is bandwidth-bound), while never materializing a K*C-wide im2col lhs.
    if pad_l > 0:
        halo_ref[:, :pad_l, :] = jnp.zeros((Bt, pad_l, C), jnp.float32)
    pad_r = H - L - pad_l
    if pad_r > 0:
        halo_ref[:, L + pad_l:, :] = jnp.zeros((Bt, pad_r, C), jnp.float32)
    halo_ref[:, pad_l:pad_l + L, :] = x

    # One MXU matmul per conv tap, accumulated in f32.  M = Bt*L rows keeps the MXU M-dim
    # full; (tap-pairing to a 256-deep contraction would fill the v6e/v7x MXU N-dim better,
    # but the kernel is HBM-bound, so the simple per-tap form is kept.)
    acc = jnp.zeros((Bt * L, C), jnp.float32)
    for i, off in enumerate(tap_offsets):                   # static & short -> unrolled
        tap = halo_ref[:, off:off + L, :].astype(compute_dtype).reshape(Bt * L, C)
        acc = acc + jnp.dot(tap, w_ref[i], preferred_element_type=jnp.float32)

    y = jnp.maximum(acc + shift_ref[...], 0.0)              # folded conv-bias + BN, then ReLU
    # Dropout: identity at inference.
    o_ref[...] = (y.reshape(Bt, L, C) + x).astype(o_ref.dtype)   # residual from original f32 x


def _pick_block_batch(N, L, bt_cap, target_rows=2048):
    """Batch elements per grid step: ~target_rows MXU rows, VMEM-capped, grid >= 2 if we can."""
    bt = max(1, min(N, bt_cap, target_rows // max(L, 1)))
    # v7x has 2 TensorCores: keep the 'parallel' batch-grid axis length >= 2 when possible.
    if bt >= N and N >= 2:
        bt = (N + 1) // 2
    return bt


def body_conv_pallas_nlc(x_nlc, weight, bias, gamma, beta, run_mean, run_var, *,
                         dilation=1, eps=1e-5, compute_dtype=jnp.bfloat16,
                         block_batch=None):
    """Channels-last core (recommended path): x_nlc (N, L, C); weight (C_out, C_in, K)."""
    N, L, C = x_nlc.shape
    C_out, C_in, K = weight.shape
    assert C_out == C and C_in == C, "BodyConv uses in_channels == out_channels == filters"

    pad_total = dilation * (K - 1)
    pad_l = pad_total // 2                                  # PyTorch 'same': smaller pad left

    # Pad L to a sublane multiple so in-kernel reshapes / halo slices are layout-free.  Zero
    # right-padding reproduces the 'same' zero halo and the padded rows are sliced off the
    # output, so semantics are unchanged (only triggers for unaligned L).
    sub = 16 if jnp.dtype(compute_dtype).itemsize < 4 else 8
    L_pad = ((L + sub - 1) // sub) * sub
    x_in = x_nlc if L_pad == L else jnp.pad(x_nlc, ((0, 0), (0, L_pad - L), (0, 0)))

    # ---- fold BatchNorm (inference, running stats) into the conv weight / bias ----
    scale = gamma / jnp.sqrt(run_var + eps)                                  # (C,)
    w_kio = jnp.transpose(weight, (2, 1, 0)) * scale[None, None, :]          # (K, C_in, C_out)
    shift = ((bias - run_mean) * scale + beta).reshape(1, C).astype(jnp.float32)

    # Drop taps that can never overlap [0, L_pad) (free static fix; only bites for tiny L).
    active = [k for k in range(K) if -L_pad < k * dilation - pad_l < L_pad]
    if active:
        w_act = jnp.stack([w_kio[k] for k in active], axis=0).astype(compute_dtype)
        tap_offsets = tuple(k * dilation for k in active)
    else:                                                   # conv sees only zero padding
        w_act = jnp.zeros((1, C, C), compute_dtype)
        tap_offsets = (0,)
    K_act = w_act.shape[0]

    # Batch tile: ~2048 MXU rows per step, capped by a per-block VMEM budget that stays safe
    # under v7x's 64 MiB VMEM; grid = cdiv (partial last block is masked, no divisibility).
    bt_cap = max(1, (36 << 20) // (12 * C * 4) // max(L_pad, 1))
    if block_batch is None:
        Bt = _pick_block_batch(N, L_pad, bt_cap)
    else:
        Bt = max(1, min(int(block_batch), N, bt_cap))
    grid_n = pl.cdiv(N, Bt)
    # TODO(synk): for very long sequences (L_pad > ~2048) add an L-tiling grid axis with a
    #             dilation*(K-1) halo instead of holding all of L in one block.

    blk_f32 = Bt * L_pad * C * 4
    w_bytes = K_act * C * C * jnp.dtype(compute_dtype).itemsize
    vmem_limit = int(12 * blk_f32 + 2 * w_bytes + (2 << 20))
    vmem_limit = min(48 << 20, max(32 << 20, vmem_limit))   # <= 48 MiB: safe on v7x (64 MiB)

    kernel = functools.partial(_body_conv_kernel, tap_offsets=tap_offsets,
                               pad_l=pad_l, compute_dtype=compute_dtype)

    out = pl.pallas_call(
        kernel,
        out_shape=jax.ShapeDtypeStruct((N, L_pad, C), x_nlc.dtype),
        grid_spec=pltpu.PrefetchScalarGridSpec(
            num_scalar_prefetch=0,
            grid=(grid_n,),
            in_specs=[
                pl.BlockSpec((Bt, L_pad, C), lambda n: (n, 0, 0)),
                # w/shift blocks are grid-invariant; pl.Buffered(1) would save one VMEM copy
                # of each, left at default double-buffering for portability.
                pl.BlockSpec((K_act, C, C), lambda n: (0, 0, 0)),
                pl.BlockSpec((1, C), lambda n: (0, 0)),
            ],
            out_specs=pl.BlockSpec((Bt, L_pad, C), lambda n: (n, 0, 0)),
            scratch_shapes=[pltpu.VMEM((Bt, L_pad + pad_total, C), jnp.float32)],
        ),
        compiler_params=pltpu.CompilerParams(
            dimension_semantics=("parallel",),
            vmem_limit_bytes=vmem_limit),
    )(x_in, w_act, shift)

    return out if L_pad == L else out[:, :L, :]


def body_conv_pallas(x_ncl, weight, bias, gamma, beta, run_mean, run_var, *,
                     dilation=1, eps=1e-5, compute_dtype=jnp.bfloat16, block_batch=None):
    """PyTorch-layout (N, C, L) convenience interface.

    The two transposes below are each a full extra HBM pass on a bandwidth-bound op;
    pipelines that can keep activations channels-last end-to-end should call
    body_conv_pallas_nlc directly (the recommended path) and skip them.
    """
    x_nlc = jnp.transpose(x_ncl, (0, 2, 1))                 # (N, L, C)
    out_nlc = body_conv_pallas_nlc(
        x_nlc, weight, bias, gamma, beta, run_mean, run_var,
        dilation=dilation, eps=eps, compute_dtype=compute_dtype, block_batch=block_batch)
    return jnp.transpose(out_nlc, (0, 2, 1))                # back to (N, C, L)


def body_conv_reference(x_ncl, weight, bias, gamma, beta, run_mean, run_var, *,
                        dilation=1, eps=1e-5):
    """Pure-JAX reference mirroring the PyTorch eval-mode forward (NCL layout)."""
    K = weight.shape[-1]
    pad_total = dilation * (K - 1)
    pad_l = pad_total // 2
    pad_r = pad_total - pad_l
    y = lax.conv_general_dilated(
        x_ncl, weight,
        window_strides=(1,),
        padding=[(pad_l, pad_r)],
        rhs_dilation=(dilation,),
        dimension_numbers=("NCH", "OIH", "NCH"))
    y = y + bias[None, :, None]
    scale = gamma / jnp.sqrt(run_var + eps)
    shift = beta - run_mean * scale
    y = y * scale[None, :, None] + shift[None, :, None]
    y = jnp.maximum(y, 0.0)
    return y + x_ncl


if __name__ == "__main__":
    # Module defaults: filters=128 (in==out channels -> lane-dense), kernel_size=6, dilation=1.
    N, C, L, K = 6, 128, 16, 6

    key = jax.random.PRNGKey(0)
    k_x, k_w, k_b, k_g, k_bt, k_m, k_v = jax.random.split(key, 7)

    x_ncl = jax.random.normal(k_x, (N, C, L), dtype=jnp.float32)
    weight = 0.1 * jax.random.normal(k_w, (C, C, K), dtype=jnp.float32)   # (C_out, C_in, K)
    bias = 0.1 * jax.random.normal(k_b, (C,), dtype=jnp.float32)
    gamma = 1.0 + 0.1 * jax.random.normal(k_g, (C,), dtype=jnp.float32)
    beta = 0.1 * jax.random.normal(k_bt, (C,), dtype=jnp.float32)
    run_mean = 0.1 * jax.random.normal(k_m, (C,), dtype=jnp.float32)
    run_var = 0.5 + jnp.abs(jax.random.normal(k_v, (C,), dtype=jnp.float32))
    params = (weight, bias, gamma, beta, run_mean, run_var)

    x_nlc = jnp.transpose(x_ncl, (0, 2, 1))                 # channels-last activations
    ref_ncl = body_conv_reference(x_ncl, *params, dilation=1)
    ref_nlc = jnp.transpose(ref_ncl, (0, 2, 1))

    # 1) Channels-last core, exact f32 MXU operands: tight check vs PyTorch-semantics ref.
    out_f32 = jax.block_until_ready(
        body_conv_pallas_nlc(x_nlc, *params, compute_dtype=jnp.float32))
    assert out_f32.shape == (N, L, C)
    assert jnp.allclose(out_f32, ref_nlc, atol=2e-4, rtol=2e-4), "f32 NLC mismatch"

    # 2) Channels-last core, default bf16 MXU operands (f32 accumulation + f32 epilogue).
    out_bf16 = jax.block_until_ready(body_conv_pallas_nlc(x_nlc, *params))
    assert jnp.allclose(out_bf16, ref_nlc, atol=7.5e-2, rtol=7.5e-2), "bf16 NLC mismatch"

    # 3) Non-divisible batch tiling: Bt=4 over N=6 -> cdiv grid, masked partial last block.
    out_pb = jax.block_until_ready(
        body_conv_pallas_nlc(x_nlc, *params, compute_dtype=jnp.float32, block_batch=4))
    assert jnp.allclose(out_pb, ref_nlc, atol=2e-4, rtol=2e-4), "partial-block mismatch"

    # 4) PyTorch-layout convenience wrapper + dilation=2 (exercises dilated tap offsets).
    ref_d2 = body_conv_reference(x_ncl, *params, dilation=2)
    out_d2 = jax.block_until_ready(
        body_conv_pallas(x_ncl, *params, dilation=2, compute_dtype=jnp.float32))
    assert out_d2.shape == (N, C, L)
    assert jnp.allclose(out_d2, ref_d2, atol=2e-4, rtol=2e-4), "NCL/dilation=2 mismatch"

    print("KERNEL_OK")
</pallas_src>

<mosaic_0001>
module attributes {stable_mosaic.version = 11 : i64} {
  func.func @_body_conv_kernel(%arg0: i32, %arg1: memref<3x16x128xf32, #tpu.memory_space<vmem>>, %arg2: memref<6x128x128xf32, #tpu.memory_space<vmem>>, %arg3: memref<1x128xf32, #tpu.memory_space<vmem>>, %arg4: memref<3x16x128xf32, #tpu.memory_space<vmem>>, %arg5: memref<3x21x128xf32, #tpu.memory_space<vmem>>) attributes {dimension_semantics = [#tpu.dimension_semantics<parallel>], iteration_bounds = array<i64: 2>, scalar_prefetch = 0 : i64, scratch_operands = 1 : i64, tpu.core_type = #tpu.core_type<tc>, window_params = [{transform_indices = @transform_0, window_bounds = array<i64: 3, 16, 128>}, {pipeline_mode = #tpu.pipeline_mode<synchronous>, transform_indices = @transform_1, window_bounds = array<i64: 6, 128, 128>}, {pipeline_mode = #tpu.pipeline_mode<synchronous>, transform_indices = @transform_2, window_bounds = array<i64: 1, 128>}, {transform_indices = @transform_3, window_bounds = array<i64: 3, 16, 128>}]} {
    %c0 = arith.constant 0 : index
    %c0_0 = arith.constant 0 : index
    %c0_1 = arith.constant 0 : index
    %0 = vector.load %arg1[%c0, %c0_0, %c0_1] : memref<3x16x128xf32, #tpu.memory_space<vmem>>, vector<3x16x128xf32>
    %cst = arith.constant 0.000000e+00 : f32
    %1 = vector.broadcast %cst : f32 to vector<3x2x128xf32>
    %c0_2 = arith.constant 0 : index
    %c0_3 = arith.constant 0 : index
    %c0_4 = arith.constant 0 : index
    %2 = vector.load %arg5[%c0_2, %c0_3, %c0_4] : memref<3x21x128xf32, #tpu.memory_space<vmem>>, vector<3x2x128xf32>
    tpu.vector_store %arg5[%c0_2, %c0_3, %c0_4], %1 {strides = array<i32>} : memref<3x21x128xf32, #tpu.memory_space<vmem>>, vector<3x2x128xf32>,
    %cst_5 = arith.constant 0.000000e+00 : f32
    %3 = vector.broadcast %cst_5 : f32 to vector<3x3x128xf32>
    %c0_6 = arith.constant 0 : index
    %c18 = arith.constant 18 : index
    %c0_7 = arith.constant 0 : index
    %4 = vector.load %arg5[%c0_6, %c18, %c0_7] : memref<3x21x128xf32, #tpu.memory_space<vmem>>, vector<3x3x128xf32>
    tpu.vector_store %arg5[%c0_6, %c18, %c0_7], %3 {strides = array<i32>} : memref<3x21x128xf32, #tpu.memory_space<vmem>>, vector<3x3x128xf32>,
    %c0_8 = arith.constant 0 : index
    %c2 = arith.constant 2 : index
    %c0_9 = arith.constant 0 : index
    %5 = vector.load %arg5[%c0_8, %c2, %c0_9] : memref<3x21x128xf32, #tpu.memory_space<vmem>>, vector<3x16x128xf32>
    tpu.vector_store %arg5[%c0_8, %c2, %c0_9], %0 {strides = array<i32>} : memref<3x21x128xf32, #tpu.memory_space<vmem>>, vector<3x16x128xf32>,
    %cst_10 = arith.constant 0.000000e+00 : f32
    %6 = vector.broadcast %cst_10 : f32 to vector<48x128xf32>
    %c0_11 = arith.constant 0 : index
    %c0_12 = arith.constant 0 : index
    %c0_13 = arith.constant 0 : index
    %7 = vector.load %arg5[%c0_11, %c0_12, %c0_13] : memref<3x21x128xf32, #tpu.memory_space<vmem>>, vector<3x16x128xf32>
    %8 = vector.shape_cast %7 : vector<3x16x128xf32> to vector<48x128xf32>
    %c0_14 = arith.constant 0 : index
    %c0_15 = arith.constant 0 : index
    %c0_16 = arith.constant 0 : index
    %9 = vector.load %arg2[%c0_14, %c0_15, %c0_16] : memref<6x128x128xf32, #tpu.memory_space<vmem>>, vector<1x128x128xf32>
    %10 = vector.shape_cast %9 : vector<1x128x128xf32> to vector<128x128xf32>
    %cst_17 = arith.constant dense<0.000000e+00> : vector<48x128xf32>
    %11 = tpu.matmul %8, %10, %cst_17 {dimension_numbers = #tpu.dot_dimension_numbers<[1], [0], [0], [1], [0, 0, 1, 1], [], []>} : vector<48x128xf32>, vector<128x128xf32>, vector<48x128xf32> -> vector<48x128xf32>
    %12 = arith.addf %6, %11 : vector<48x128xf32>
    %c0_18 = arith.constant 0 : index
    %c1 = arith.constant 1 : index
    %c0_19 = arith.constant 0 : index
    %13 = vector.load %arg5[%c0_18, %c1, %c0_19] : memref<3x21x128xf32, #tpu.memory_space<vmem>>, vector<3x16x128xf32>
    %14 = vector.shape_cast %13 : vector<3x16x128xf32> to vector<48x128xf32>
    %c1_20 = arith.constant 1 : index
    %c0_21 = arith.constant 0 : index
    %c0_22 = arith.constant 0 : index
    %15 = vector.load %arg2[%c1_20, %c0_21, %c0_22] : memref<6x128x128xf32, #tpu.memory_space<vmem>>, vector<1x128x128xf32>
    %16 = vector.shape_cast %15 : vector<1x128x128xf32> to vector<128x128xf32>
    %cst_23 = arith.constant dense<0.000000e+00> : vector<48x128xf32>
    %17 = tpu.matmul %14, %16, %cst_23 {dimension_numbers = #tpu.dot_dimension_numbers<[1], [0], [0], [1], [0, 0, 1, 1], [], []>} : vector<48x128xf32>, vector<128x128xf32>, vector<48x128xf32> -> vector<48x128xf32>
    %18 = arith.addf %12, %17 : vector<48x128xf32>
    %c0_24 = arith.constant 0 : index
    %c2_25 = arith.constant 2 : index
    %c0_26 = arith.constant 0 : index
    %19 = vector.load %arg5[%c0_24, %c2_25, %c0_26] : memref<3x21x128xf32, #tpu.memory_space<vmem>>, vector<3x16x128xf32>
    %20 = vector.shape_cast %19 : vector<3x16x128xf32> to vector<48x128xf32>
    %c2_27 = arith.constant 2 : index
    %c0_28 = arith.constant 0 : index
    %c0_29 = arith.constant 0 : index
    %21 = vector.load %arg2[%c2_27, %c0_28, %c0_29] : memref<6x128x128xf32, #tpu.memory_space<vmem>>, vector<1x128x128xf32>
    %22 = vector.shape_cast %21 : vector<1x128x128xf32> to vector<128x128xf32>
    %cst_30 = arith.constant dense<0.000000e+00> : vector<48x128xf32>
    %23 = tpu.matmul %20, %22, %cst_30 {dimension_numbers = #tpu.dot_dimension_numbers<[1], [0], [0], [1], [0, 0, 1, 1], [], []>} : vector<48x128xf32>, vector<128x128xf32>, vector<48x128xf32> -> vector<48x128xf32>
    %24 = arith.addf %18, %23 : vector<48x128xf32>
    %c0_31 = arith.constant 0 : index
    %c3 = arith.constant 3 : index
    %c0_32 = arith.constant 0 : index
    %25 = vector.load %arg5[%c0_31, %c3, %c0_32] : memref<3x21x128xf32, #tpu.memory_space<vmem>>, vector<3x16x128xf32>
    %26 = vector.shape_cast %25 : vector<3x16x128xf32> to vector<48x128xf32>
    %c3_33 = arith.constant 3 : index
    %c0_34 = arith.constant 0 : index
    %c0_35 = arith.constant 0 : index
    %27 = vector.load %arg2[%c3_33, %c0_34, %c0_35] : memref<6x128x128xf32, #tpu.memory_space<vmem>>, vector<1x128x128xf32>
    %28 = vector.shape_cast %27 : vector<1x128x128xf32> to vector<128x128xf32>
    %cst_36 = arith.constant dense<0.000000e+00> : vector<48x128xf32>
    %29 = tpu.matmul %26, %28, %cst_36 {dimension_numbers = #tpu.dot_dimension_numbers<[1], [0], [0], [1], [0, 0, 1, 1], [], []>} : vector<48x128xf32>, vector<128x128xf32>, vector<48x128xf32> -> vector<48x128xf32>
    %30 = arith.addf %24, %29 : vector<48x128xf32>
    %c0_37 = arith.constant 0 : index
    %c4 = arith.constant 4 : index
    %c0_38 = arith.constant 0 : index
    %31 = vector.load %arg5[%c0_37, %c4, %c0_38] : memref<3x21x128xf32, #tpu.memory_space<vmem>>, vector<3x16x128xf32>
    %32 = vector.shape_cast %31 : vector<3x16x128xf32> to vector<48x128xf32>
    %c4_39 = arith.constant 4 : index
    %c0_40 = arith.constant 0 : index
    %c0_41 = arith.constant 0 : index
    %33 = vector.load %arg2[%c4_39, %c0_40, %c0_41] : memref<6x128x128xf32, #tpu.memory_space<vmem>>, vector<1x128x128xf32>
    %34 = vector.shape_cast %33 : vector<1x128x128xf32> to vector<128x128xf32>
    %cst_42 = arith.constant dense<0.000000e+00> : vector<48x128xf32>
    %35 = tpu.matmul %32, %34, %cst_42 {dimension_numbers = #tpu.dot_dimension_numbers<[1], [0], [0], [1], [0, 0, 1, 1], [], []>} : vector<48x128xf32>, vector<128x128xf32>, vector<48x128xf32> -> vector<48x128xf32>
    %36 = arith.addf %30, %35 : vector<48x128xf32>
    %c0_43 = arith.constant 0 : index
    %c5 = arith.constant 5 : index
    %c0_44 = arith.constant 0 : index
    %37 = vector.load %arg5[%c0_43, %c5, %c0_44] : memref<3x21x128xf32, #tpu.memory_space<vmem>>, vector<3x16x128xf32>
    %38 = vector.shape_cast %37 : vector<3x16x128xf32> to vector<48x128xf32>
    %c5_45 = arith.constant 5 : index
    %c0_46 = arith.constant 0 : index
    %c0_47 = arith.constant 0 : index
    %39 = vector.load %arg2[%c5_45, %c0_46, %c0_47] : memref<6x128x128xf32, #tpu.memory_space<vmem>>, vector<1x128x128xf32>
    %40 = vector.shape_cast %39 : vector<1x128x128xf32> to vector<128x128xf32>
    %cst_48 = arith.constant dense<0.000000e+00> : vector<48x128xf32>
    %41 = tpu.matmul %38, %40, %cst_48 {dimension_numbers = #tpu.dot_dimension_numbers<[1], [0], [0], [1], [0, 0, 1, 1], [], []>} : vector<48x128xf32>, vector<128x128xf32>, vector<48x128xf32> -> vector<48x128xf32>
    %42 = arith.addf %36, %41 : vector<48x128xf32>
    %c0_49 = arith.constant 0 : index
    %c0_50 = arith.constant 0 : index
    %43 = vector.load %arg3[%c0_49, %c0_50] : memref<1x128xf32, #tpu.memory_space<vmem>>, vector<1x128xf32>
    %44 = vector.broadcast %43 : vector<1x128xf32> to vector<48x128xf32>
    %45 = arith.addf %42, %44 : vector<48x128xf32>
    %cst_51 = arith.constant 0.000000e+00 : f32
    %46 = vector.broadcast %cst_51 : f32 to vector<48x128xf32>
    %47 = arith.maximumf %45, %46 : vector<48x128xf32>
    %48 = vector.shape_cast %47 : vector<48x128xf32> to vector<3x16x128xf32>
    %49 = arith.addf %48, %0 : vector<3x16x128xf32>
    %c0_52 = arith.constant 0 : index
    %c0_53 = arith.constant 0 : index
    %c0_54 = arith.constant 0 : index
    %50 = vector.load %arg4[%c0_52, %c0_53, %c0_54] : memref<3x16x128xf32, #tpu.memory_space<vmem>>, vector<3x16x128xf32>
    tpu.vector_store %arg4[%c0_52, %c0_53, %c0_54], %49 {strides = array<i32>} : memref<3x16x128xf32, #tpu.memory_space<vmem>>, vector<3x16x128xf32>,
    return
  }
  func.func @transform_0(%arg0: i32) -> (i32, i32, i32) {
    %c0_i32 = arith.constant 0 : i32
    %c0_i32_0 = arith.constant 0 : i32
    %c0_i32_1 = arith.constant 0 : i32
    return %arg0, %c0_i32, %c0_i32_0 : i32, i32, i32
  }
  func.func @transform_1(%arg0: i32) -> (i32, i32, i32) {
    %c0_i32 = arith.constant 0 : i32
    %c0_i32_0 = arith.constant 0 : i32
    %c0_i32_1 = arith.constant 0 : i32
    %c0_i32_2 = arith.constant 0 : i32
    return %c0_i32, %c0_i32_0, %c0_i32_1 : i32, i32, i32
  }
  func.func @transform_2(%arg0: i32) -> (i32, i32) {
    %c0_i32 = arith.constant 0 : i32
    %c0_i32_0 = arith.constant 0 : i32
    %c0_i32_1 = arith.constant 0 : i32
    return %c0_i32, %c0_i32_0 : i32, i32
  }
  func.func @transform_3(%arg0: i32) -> (i32, i32, i32) {
    %c0_i32 = arith.constant 0 : i32
    %c0_i32_0 = arith.constant 0 : i32
    %c0_i32_1 = arith.constant 0 : i32
    return %arg0, %c0_i32, %c0_i32_0 : i32, i32, i32
  }
}

</mosaic_0001>

<llo_original>
// kernel: tpu_custom_call.1
$region0: #{tpu_custom_call.1}
  #allocation0 [shape = 'u32[]', space=smem, size = 0x4, offset = 0x4, fixed_abs, tag = 'smem constant byte address 0x4 - core index']
  #allocation1 [shape = 'u32[144,128]{1,0:T(1,128)}', space=vmem, size = 0x12000, scoped, tag = 'internal scratch']
  #allocation2 [shape = 'f32[3,21,128]{2,1,0:T(8,128)}', space=vmem, size = 0x9000, scoped, tag = 'scratch operand']
  %s0 = inlined_call_operand.hbm [shape: f32[6,16,128], index: 0, kind: input, shape index: {}]
  %s1 = inlined_call_operand.hbm [shape: f32[6,128,128], index: 1, kind: input, shape index: {}]
  %s2 = inlined_call_operand.vmem [shape: f32[1,128], index: 2, kind: input, shape index: {}]
  %s3 = inlined_call_operand.hbm [shape: f32[6,16,128], index: 3, kind: output, shape index: {}]
  %s4 = sld [smem:[#allocation0]]
  $region53: #{tpu_custom_call.1} parent=0
    _
  %s6 = ssub.s32 1, %s4
  %s7 = scalar_select 0, %s6, %s4
  $region1: #{tpu_custom_call.1} parent=0
    #allocation3 [shape = 'u8[49152]{0}', space=vmem, size = 0xc000, scoped, tag = 'input window, operand 0']
    #allocation4 [shape = 's32[2]{0}', space=sflag, size = 0x8, scoped, tag = 'scoped memory for tpu_custom_call.1']
    #allocation5 [shape = 's32[2]{0}', space=sflag, size = 0x8, scoped, tag = 'scoped memory for tpu_custom_call.1']
    #allocation6 [shape = 'u8[393216]{0}', space=vmem, size = 0x60000, scoped, tag = 'input window, operand 1, single buffered']
    #allocation7 [shape = 's32[1]{0}', space=sflag, size = 0x4, scoped, tag = 'scoped memory for tpu_custom_call.1']
    #allocation8 [shape = 'u8[49152]{0}', space=vmem, size = 0xc000, scoped, tag = 'output window, operand 0']
    %8 = vsyncpa [#allocation4], 0
    %s9 = scalar_lea.sflag [#allocation4], 1
    %10 = vsyncpa %s9, 0
    %11 = vsyncpa [#allocation7], 0
    %12 = vsyncpa [#allocation5], 0
    %s13 = scalar_lea.sflag [#allocation5], 1
    %14 = vsyncpa %s13, 0
    loop: start=0, step=1, limit=4
    $region2: #{tpu_custom_call.1} parent=1 // loop_pre_header
      _
    $region3: #{tpu_custom_call.1} parent=1 // loop_header
      %s16 = sphi 0, %s20
      %p17 = scmp.ge.s32.totalorder %s16, 4
      %s26 = sphi 0, %s28
      %s29 = sphi 0, %s26
      %s30 = sphi 0, %s29
      %s46 = sphi 0, %s30
      %s50 = sphi 0, %s50
      %s52 = sphi 0, %s50
      %s53 = sphi 0, %s52
      %s67 = sphi 0, %s53
      %s71 = sphi 0, %s71
      %s73 = sphi 0, %s71
      %s74 = sphi 0, %s73
      %s88 = sphi 0, %s74
      %s94 = sphi 0, %s96
      %s97 = sphi 0, %s94
      %s98 = sphi 0, %s97
      %s114 = sphi 0, %s98
    $region4: #{tpu_custom_call.1} parent=1 // loop_header_branch
      %19 = sbr.rel (%p17) target = $region8
    $region5: #{tpu_custom_call.1} parent=1 // loop_body
      %s21 = ssub.s32 %s16, 1
      %s22 = ssub.s32 %s16, 2
      %s23 = sadd.s32 %s16, 1
      %s24 = ssub.s32 %s16, %s23
      %p25 = scmp.eq.s32.totalorder %s24, 0
      %s27 = sadd.s32 %s26, 1
      %s28 = scalar_select %p25, %s26, %s27
      %p31 = pneg %p25
      %p32 = scmp.eq.s32.totalorder %s16, 1
      %p33 = por %p31, %p32
      %p34 = scmp.ne.s32.totalorder %s26, %s29
      %p35 = scmp.eq.s32.totalorder %s16, 0
      %p36 = por %p34, %p35
      %p37 = scmp.ne.s32.totalorder %s26, %s29
      %p38 = scmp.eq.s32.totalorder %s21, 1
      %p39 = por %p37, %p38
      %p40 = scmp.ne.s32.totalorder %s29, %s30
      %p41 = scmp.eq.s32.totalorder %s21, 0
      %p42 = por %p40, %p41
      %p43 = scmp.ne.s32.totalorder %s29, %s30
      %p44 = scmp.eq.s32.totalorder %s22, 1
      %p45 = por %p43, %p44
      %p47 = scmp.ne.s32.totalorder %s30, %s46
      %p48 = scmp.eq.s32.totalorder %s22, 0
      %p49 = por %p47, %p48
      %s51 = sadd.s32 %s50, 1
      %p54 = scmp.eq.s32.totalorder %s16, 1
      %p55 = scmp.ne.s32.totalorder %s50, %s52
      %p56 = scmp.eq.s32.totalorder %s16, 0
      %p57 = por %p55, %p56
      %p58 = scmp.ne.s32.totalorder %s50, %s52
      %p59 = scmp.eq.s32.totalorder %s21, 1
      %p60 = por %p58, %p59
      %p61 = scmp.ne.s32.totalorder %s52, %s53
      %p62 = scmp.eq.s32.totalorder %s21, 0
      %p63 = por %p61, %p62
      %p64 = scmp.ne.s32.totalorder %s52, %s53
      %p65 = scmp.eq.s32.totalorder %s22, 1
      %p66 = por %p64, %p65
      %p68 = scmp.ne.s32.totalorder %s53, %s67
      %p69 = scmp.eq.s32.totalorder %s22, 0
      %p70 = por %p68, %p69
      %s72 = sadd.s32 %s71, 1
      %p75 = scmp.eq.s32.totalorder %s16, 1
      %p76 = scmp.ne.s32.totalorder %s71, %s73
      %p77 = scmp.eq.s32.totalorder %s16, 0
      %p78 = por %p76, %p77
      %p79 = scmp.ne.s32.totalorder %s71, %s73
      %p80 = scmp.eq.s32.totalorder %s21, 1
      %p81 = por %p79, %p80
      %p82 = scmp.ne.s32.totalorder %s73, %s74
      %p83 = scmp.eq.s32.totalorder %s21, 0
      %p84 = por %p82, %p83
      %p85 = scmp.ne.s32.totalorder %s73, %s74
      %p86 = scmp.eq.s32.totalorder %s22, 1
      %p87 = por %p85, %p86
      %p89 = scmp.ne.s32.totalorder %s74, %s88
      %p90 = scmp.eq.s32.totalorder %s22, 0
      %p91 = por %p89, %p90
      %s92 = ssub.s32 %s16, %s23
      %p93 = scmp.eq.s32.totalorder %s92, 0
      %s95 = sadd.s32 %s94, 1
      %s96 = scalar_select %p93, %s94, %s95
      %p99 = pneg %p93
      %p100 = scmp.eq.s32.totalorder %s16, 1
      %p101 = por %p99, %p100
      %p102 = scmp.ne.s32.totalorder %s94, %s97
      %p103 = scmp.eq.s32.totalorder %s16, 0
      %p104 = por %p102, %p103
      %p105 = scmp.ne.s32.totalorder %s94, %s97
      %p106 = scmp.eq.s32.totalorder %s21, 1
      %p107 = por %p105, %p106
      %p108 = scmp.ne.s32.totalorder %s97, %s98
      %p109 = scmp.eq.s32.totalorder %s21, 0
      %p110 = por %p108, %p109
      %p111 = scmp.ne.s32.totalorder %s97, %s98
      %p112 = scmp.eq.s32.totalorder %s22, 1
      %p113 = por %p111, %p112
      %p115 = scmp.ne.s32.totalorder %s98, %s114
      %p116 = scmp.eq.s32.totalorder %s22, 0
      %p117 = por %p115, %p116
      %p118 = scmp.le.s32.totalorder 1, %s16
      %p119 = scmp.lt.s32.totalorder %s16, 3
      %p120 = pnand %p118, %p119
      %p121 = pneg %p120
      // Predicated region
      $region9: #{tpu_custom_call.1} parent=5 // pred_check
        _
      $region10: #{tpu_custom_call.1} parent=5 // pred_check_branch
        %123 = sbr.rel (%p120) target = $region12
      $region11: #{tpu_custom_call.1} parent=5 // pred_region
        %s124 = ssub.s32 %s16, 1
        // Predicated region
        $region13: #{tpu_custom_call.1} parent=11 // pred_check
          %p125 = pneg %p63
        $region14: #{tpu_custom_call.1} parent=11 // pred_check_branch
          %127 = sbr.rel (%p125) target = $region16
        $region15: #{tpu_custom_call.1} parent=11 // pred_region
          %s129 = ssub.s32 12288, 12288
          %130 = vsyncadd [#allocation7], %s129
          %s131 = sshll.u32 [#allocation6], 4
          %s132 = int_to_ptr.vmem [resolvable:$true] %s131
          %137 = dma.hbm_to_vmem [thread:$0]  %s1, 12288, %s132, [#allocation7], 128, 128, 8
        $region16: #{tpu_custom_call.1} parent=11 // pred_fallthru
          _
        // Predicated region
        $region17: #{tpu_custom_call.1} parent=11 // pred_check
          %p138 = pneg %p84
        $region18: #{tpu_custom_call.1} parent=11 // pred_check_branch
          %140 = sbr.rel (%p138) target = $region20
        $region19: #{tpu_custom_call.1} parent=11 // pred_region
          _
        $region20: #{tpu_custom_call.1} parent=11 // pred_fallthru
          _
      $region12: #{tpu_custom_call.1} parent=5 // pred_fallthru
        _
      %p141 = scmp.lt.s32.totalorder %s16, 2
      // Predicated region
      $region21: #{tpu_custom_call.1} parent=5 // pred_check
        %p142 = pneg %p141
      $region22: #{tpu_custom_call.1} parent=5 // pred_check_branch
        %144 = sbr.rel (%p142) target = $region24
      $region23: #{tpu_custom_call.1} parent=5 // pred_region
        // Predicated region
        $region25: #{tpu_custom_call.1} parent=23 // pred_check
          %p145 = pneg %p36
        $region26: #{tpu_custom_call.1} parent=23 // pred_check_branch
          %147 = sbr.rel (%p145) target = $region28
        $region27: #{tpu_custom_call.1} parent=23 // pred_region
          %s148 = sand.u32 %s26, 1
          %s149 = scalar_lea.sflag [#allocation4], %s148
          %s150 = sand.u32 %s26, 1
          %s151 = smul.addr %s150, 48
          %s152 = scalar_lea.vmem [#allocation3], %s151
          %s153 = smul.u32 3, %s16
          %s155 = ssub.s32 768, 768
          %156 = vsyncadd %s149, %s155
          %s157 = smul.addr %s153, 2
          %s158 = smul.addr %s157, 128
          %s159 = scalar_lea.hbm %s0, %s158
          %s160 = sshll.u32 %s152, 4
          %s161 = int_to_ptr.vmem [resolvable:$true] %s160
          %166 = dma.hbm_to_vmem [thread:$0]  %s159, 768, %s161, %s149, 128, 128, 8
        $region28: #{tpu_custom_call.1} parent=23 // pred_fallthru
          _
      $region24: #{tpu_custom_call.1} parent=5 // pred_fallthru
        _
      %p167 = scmp.le.s32.totalorder 1, %s16
      %p168 = scmp.lt.s32.totalorder %s16, 3
      %p169 = pnand %p167, %p168
      %p170 = pneg %p169
      // Predicated region
      $region29: #{tpu_custom_call.1} parent=5 // pred_check
        _
      $region30: #{tpu_custom_call.1} parent=5 // pred_check_branch
        %172 = sbr.rel (%p169) target = $region32
      $region31: #{tpu_custom_call.1} parent=5 // pred_region
        %s173 = ssub.s32 %s16, 1
        %s174 = sand.u32 %s29, 1
        %s175 = scalar_lea.sflag [#allocation4], %s174
        %s176 = sand.u32 %s29, 1
        %s177 = smul.addr %s176, 48
        %s178 = scalar_lea.vmem [#allocation3], %s177
        // Predicated region
        $region33: #{tpu_custom_call.1} parent=31 // pred_check
          %p179 = pneg %p42
        $region34: #{tpu_custom_call.1} parent=31 // pred_check_branch
          %181 = sbr.rel (%p179) target = $region36
        $region35: #{tpu_custom_call.1} parent=31 // pred_region
          %182 = dma.done %s175, 768
        $region36: #{tpu_custom_call.1} parent=31 // pred_fallthru
          _
        // Predicated region
        $region37: #{tpu_custom_call.1} parent=31 // pred_check
          %p183 = pneg %p63
        $region38: #{tpu_custom_call.1} parent=31 // pred_check_branch
          %185 = sbr.rel (%p183) target = $region40
        $region39: #{tpu_custom_call.1} parent=31 // pred_region
          %186 = dma.done [#allocation7], 12288
        $region40: #{tpu_custom_call.1} parent=31 // pred_fallthru
          _
        %s187 = sand.u32 %s29, 1
        %s188 = scalar_lea.sflag [#allocation4], %s187
        %s189 = sand.u32 %s29, 1
        %s190 = smul.addr %s189, 48
        %s191 = scalar_lea.vmem [#allocation3], %s190
        %p192 = pneg %p42
        %p193 = pneg %p39
        %p194 = pneg %p63
        %p195 = pneg %p60
        %p196 = pneg %p84
        %p197 = pneg %p81
        %p198 = pneg %p110
        %p199 = pneg %p107
        %s200 = sand.u32 %s97, 1
        %s201 = scalar_lea.sflag [#allocation5], %s200
        %s202 = sand.u32 %s97, 1
        %s203 = smul.addr %s202, 48
        %s204 = scalar_lea.vmem [#allocation8], %s203
        %s205 = smul.u32 3, %s21
        %s206 = smul.u32 3, %s21
        %v207 = vld [vmem:[%s178] sm:$0xff]
        %v208 = vld [vmem:[%s178 + $0x8] sm:$0xff]
        %v209 = vld [vmem:[%s178 + $0x10] sm:$0xff]
        %v210 = vld [vmem:[%s178 + $0x18] sm:$0xff]
        %v211 = vld [vmem:[%s178 + $0x20] sm:$0xff]
        %v212 = vld [vmem:[%s178 + $0x28] sm:$0xff]
        %213 = vst [vmem:[#allocation2] sm:$0x3] 0.0
        %214 = vst [vmem:[#allocation2 + $0x18] sm:$0x3] 0.0
        %215 = vst [vmem:[#allocation2 + $0x30] sm:$0x3] 0.0
        %216 = vst [vmem:[#allocation2 + $0x12] sm:$0x7] 0.0
        %217 = vst [vmem:[#allocation2 + $0x2a] sm:$0x7] 0.0
        %218 = vst [vmem:[#allocation2 + $0x42] sm:$0x7] 0.0
        %219 = vst [vmem:[#allocation2 + $0x2] sm:$0xff] %v207
        %220 = vst [vmem:[#allocation2 + $0xa] sm:$0xff] %v208
        %221 = vst [vmem:[#allocation2 + $0x1a] sm:$0xff] %v209
        %222 = vst [vmem:[#allocation2 + $0x22] sm:$0xff] %v210
        %223 = vst [vmem:[#allocation2 + $0x32] sm:$0xff] %v211
        %224 = vst [vmem:[#allocation2 + $0x3a] sm:$0xff] %v212
        %v225 = vld [vmem:[#allocation2] sm:$0xff]
        %v226 = vld [vmem:[#allocation2 + $0x8] sm:$0xff]
        %v227 = vld [vmem:[#allocation2 + $0x18] sm:$0xff]
        %v228 = vld [vmem:[#allocation2 + $0x20] sm:$0xff]
        %v229 = vld [vmem:[#allocation2 + $0x30] sm:$0xff]
        %v230 = vld [vmem:[#allocation2 + $0x38] sm:$0xff]
        %v231 = vld [vmem:[#allocation6] sm:$0xff]
        %v232 = vld [vmem:[#allocation6 + $0x8] sm:$0xff]
        %v233 = vld [vmem:[#allocation6 + $0x10] sm:$0xff]
        %v234 = vld [vmem:[#allocation6 + $0x18] sm:$0xff]
        %v235 = vld [vmem:[#allocation6 + $0x20] sm:$0xff]
        %v236 = vld [vmem:[#allocation6 + $0x28] sm:$0xff]
        %v237 = vld [vmem:[#allocation6 + $0x30] sm:$0xff]
        %v238 = vld [vmem:[#allocation6 + $0x38] sm:$0xff]
        %v239 = vld [vmem:[#allocation6 + $0x40] sm:$0xff]
        %v240 = vld [vmem:[#allocation6 + $0x48] sm:$0xff]
        %v241 = vld [vmem:[#allocation6 + $0x50] sm:$0xff]
        %v242 = vld [vmem:[#allocation6 + $0x58] sm:$0xff]
        %v243 = vld [vmem:[#allocation6 + $0x60] sm:$0xff]
        %v244 = vld [vmem:[#allocation6 + $0x68] sm:$0xff]
        %v245 = vld [vmem:[#allocation6 + $0x70] sm:$0xff]
        %v246 = vld [vmem:[#allocation6 + $0x78] sm:$0xff]
        %v247 = vld [vmem:[#allocation2 + $0x1] sm:$0xff]
        %v248 = vld [vmem:[#allocation2 + $0x9] sm:$0xff]
        %v249 = vld [vmem:[#allocation2 + $0x19] sm:$0xff]
        %v250 = vld [vmem:[#allocation2 + $0x21] sm:$0xff]
        %v251 = vld [vmem:[#allocation2 + $0x31] sm:$0xff]
        %v252 = vld [vmem:[#allocation2 + $0x39] sm:$0xff]
        %s253 = scalar_lea.vmem [#allocation6], 128
        %v254 = vld [vmem:[%s253] sm:$0xff]
        %v255 = vld [vmem:[%s253 + $0x8] sm:$0xff]
        %v256 = vld [vmem:[%s253 + $0x10] sm:$0xff]
        %v257 = vld [vmem:[%s253 + $0x18] sm:$0xff]
        %v258 = vld [vmem:[%s253 + $0x20] sm:$0xff]
        %v259 = vld [vmem:[%s253 + $0x28] sm:$0xff]
        %v260 = vld [vmem:[%s253 + $0x30] sm:$0xff]
        %v261 = vld [vmem:[%s253 + $0x38] sm:$0xff]
        %v262 = vld [vmem:[%s253 + $0x40] sm:$0xff]
        %v263 = vld [vmem:[%s253 + $0x48] sm:$0xff]
        %v264 = vld [vmem:[%s253 + $0x50] sm:$0xff]
        %v265 = vld [vmem:[%s253 + $0x58] sm:$0xff]
        %v266 = vld [vmem:[%s253 + $0x60] sm:$0xff]
        %v267 = vld [vmem:[%s253 + $0x68] sm:$0xff]
        %v268 = vld [vmem:[%s253 + $0x70] sm:$0xff]
        %v269 = vld [vmem:[%s253 + $0x78] sm:$0xff]
        %270 = vmatprep.subr.mxu0 0.0
        %271 = vmatpush1.msra.mxu0 %v254
        %272 = vmatprep.subr.mxu0 0.0
        %273 = vmatpush1.msra.mxu0 %v255
        %274 = vmatprep.subr.mxu0 0.0
        %275 = vmatpush1.msra.mxu0 %v256
        %276 = vmatprep.subr.mxu0 0.0
        %277 = vmatpush1.msra.mxu0 %v257
        %278 = vmatprep.subr.mxu0 0.0
        %279 = vmatpush1.msra.mxu0 %v258
        %280 = vmatprep.subr.mxu0 0.0
        %281 = vmatpush1.msra.mxu0 %v259
        %282 = vmatprep.subr.mxu0 0.0
        %283 = vmatpush1.msra.mxu0 %v260
        %284 = vmatprep.subr.mxu0 0.0
        %285 = vmatpush1.msra.mxu0 %v261
        %286 = vmatprep.subr.mxu0 0.0
        %287 = vmatpush1.msra.mxu0 %v262
        %288 = vmatprep.subr.mxu0 0.0
        %289 = vmatpush1.msra.mxu0 %v263
        %290 = vmatprep.subr.mxu0 0.0
        %291 = vmatpush1.msra.mxu0 %v264
        %292 = vmatprep.subr.mxu0 0.0
        %293 = vmatpush1.msra.mxu0 %v265
        %294 = vmatprep.subr.mxu0 0.0
        %295 = vmatpush1.msra.mxu0 %v266
        %296 = vmatprep.subr.mxu0 0.0
        %297 = vmatpush1.msra.mxu0 %v267
        %298 = vmatprep.subr.mxu0 0.0
        %299 = vmatpush1.msra.mxu0 %v268
        %300 = vmatprep.subr.mxu0 0.0
        %301 = vmatpush1.msra.mxu0 %v269
        %302 = vmatprep.subr.mxu0 0.0
        %303 = vmatpush1.msra.mxu0 0.0
        %304 = vmatprep.subr.mxu0 0.0
        %305 = vmatpush1.msra.mxu0 0.0
        %306 = vmatprep.subr.mxu0 0.0
        %307 = vmatpush1.msra.mxu0 0.0
        %308 = vmatprep.subr.mxu0 0.0
        %309 = vmatpush1.msra.mxu0 0.0
        %310 = vmatprep.subr.mxu0 0.0
        %311 = vmatpush1.msra.mxu0 0.0
        %312 = vmatprep.subr.mxu0 0.0
        %313 = vmatpush1.msra.mxu0 0.0
        %314 = vmatprep.subr.mxu0 0.0
        %315 = vmatpush1.msra.mxu0 0.0
        %316 = vmatprep.subr.mxu0 0.0
        %317 = vmatpush1.msra.mxu0 0.0
        %318 = vmatprep.subr.mxu0 0.0
        %319 = vmatpush1.msra.mxu0 0.0
        %320 = vmatprep.subr.mxu0 0.0
        %321 = vmatpush1.msra.mxu0 0.0
        %322 = vmatprep.subr.mxu0 0.0
        %323 = vmatpush1.msra.mxu0 0.0
        %324 = vmatprep.subr.mxu0 0.0
        %325 = vmatpush1.msra.mxu0 0.0
        %326 = vmatprep.subr.mxu0 0.0
        %327 = vmatpush1.msra.mxu0 0.0
        %328 = vmatprep.subr.mxu0 0.0
        %329 = vmatpush1.msra.mxu0 0.0
        %330 = vmatprep.subr.mxu0 0.0
        %331 = vmatpush1.msra.mxu0 0.0
        %332 = vmatprep.subr.mxu0 0.0
        %333 = vmatpush1.msra.mxu0 0.0
        %334 = vmatprep.mubr.f32.mxu0 0.0
        %335 = vmatmul.mubr.f32.gmra.mrb[0].mxu0 %v247
        %v336 = vpop.f32.mrb[0].mxu0
        %v337 = vadd.f32 0.0, %v336
        %v338 = vpop.f32.mrb[0].mxu0
        %339 = vmatprep.mubr.f32.mxu0 0.0
        %340 = vmatmul.mubr.f32.gmra.mrb[0].mxu0 %v248
        %v341 = vpop.f32.mrb[0].mxu0
        %v342 = vadd.f32 0.0, %v341
        %v343 = vpop.f32.mrb[0].mxu0
        %344 = vmatprep.mubr.f32.mxu0 0.0
        %345 = vmatmul.mubr.f32.gmra.mrb[0].mxu0 %v249
        %v346 = vpop.f32.mrb[0].mxu0
        %v347 = vadd.f32 0.0, %v346
        %v348 = vpop.f32.mrb[0].mxu0
        %349 = vmatprep.mubr.f32.mxu0 0.0
        %350 = vmatmul.mubr.f32.gmra.mrb[0].mxu0 %v250
        %v351 = vpop.f32.mrb[0].mxu0
        %v352 = vadd.f32 0.0, %v351
        %v353 = vpop.f32.mrb[0].mxu0
        %354 = vmatprep.mubr.f32.mxu0 0.0
        %355 = vmatmul.mubr.f32.gmra.mrb[0].mxu0 %v251
        %v356 = vpop.f32.mrb[0].mxu0
        %v357 = vadd.f32 0.0, %v356
        %v358 = vpop.f32.mrb[0].mxu0
        %359 = vmatprep.mubr.f32.mxu0 0.0
        %360 = vmatmul.mubr.f32.gmra.mrb[0].mxu0 %v252
        %v361 = vpop.f32.mrb[0].mxu0
        %v362 = vadd.f32 0.0, %v361
        %v363 = vpop.f32.mrb[0].mxu0
        %364 = vdwg.mxu0
        %365 = vmatprep.subr.mxu0 0.0
        %366 = vmatpush1.msra.mxu0 %v231
        %367 = vmatprep.subr.mxu0 0.0
        %368 = vmatpush1.msra.mxu0 %v232
        %369 = vmatprep.subr.mxu0 0.0
        %370 = vmatpush1.msra.mxu0 %v233
        %371 = vmatprep.subr.mxu0 0.0
        %372 = vmatpush1.msra.mxu0 %v234
        %373 = vmatprep.subr.mxu0 0.0
        %374 = vmatpush1.msra.mxu0 %v235
        %375 = vmatprep.subr.mxu0 0.0
        %376 = vmatpush1.msra.mxu0 %v236
        %377 = vmatprep.subr.mxu0 0.0
        %378 = vmatpush1.msra.mxu0 %v237
        %379 = vmatprep.subr.mxu0 0.0
        %380 = vmatpush1.msra.mxu0 %v238
        %381 = vmatprep.subr.mxu0 0.0
        %382 = vmatpush1.msra.mxu0 %v239
        %383 = vmatprep.subr.mxu0 0.0
        %384 = vmatpush1.msra.mxu0 %v240
        %385 = vmatprep.subr.mxu0 0.0
        %386 = vmatpush1.msra.mxu0 %v241
        %387 = vmatprep.subr.mxu0 0.0
        %388 = vmatpush1.msra.mxu0 %v242
        %389 = vmatprep.subr.mxu0 0.0
        %390 = vmatpush1.msra.mxu0 %v243
        %391 = vmatprep.subr.mxu0 0.0
        %392 = vmatpush1.msra.mxu0 %v244
        %393 = vmatprep.subr.mxu0 0.0
        %394 = vmatpush1.msra.mxu0 %v245
        %395 = vmatprep.subr.mxu0 0.0
        %396 = vmatpush1.msra.mxu0 %v246
        %397 = vmatprep.subr.mxu0 0.0
        %398 = vmatpush1.msra.mxu0 0.0
        %399 = vmatprep.subr.mxu0 0.0
        %400 = vmatpush1.msra.mxu0 0.0
        %401 = vmatprep.subr.mxu0 0.0
        %402 = vmatpush1.msra.mxu0 0.0
        %403 = vmatprep.subr.mxu0 0.0
        %404 = vmatpush1.msra.mxu0 0.0
        %405 = vmatprep.subr.mxu0 0.0
        %406 = vmatpush1.msra.mxu0 0.0
        %407 = vmatprep.subr.mxu0 0.0
        %408 = vmatpush1.msra.mxu0 0.0
        %409 = vmatprep.subr.mxu0 0.0
        %410 = vmatpush1.msra.mxu0 0.0
        %411 = vmatprep.subr.mxu0 0.0
        %412 = vmatpush1.msra.mxu0 0.0
        %413 = vmatprep.subr.mxu0 0.0
        %414 = vmatpush1.msra.mxu0 0.0
        %415 = vmatprep.subr.mxu0 0.0
        %416 = vmatpush1.msra.mxu0 0.0
        %417 = vmatprep.subr.mxu0 0.0
        %418 = vmatpush1.msra.mxu0 0.0
        %419 = vmatprep.subr.mxu0 0.0
        %420 = vmatpush1.msra.mxu0 0.0
        %421 = vmatprep.subr.mxu0 0.0
        %422 = vmatpush1.msra.mxu0 0.0
        %423 = vmatprep.subr.mxu0 0.0
        %424 = vmatpush1.msra.mxu0 0.0
        %425 = vmatprep.subr.mxu0 0.0
        %426 = vmatpush1.msra.mxu0 0.0
        %427 = vmatprep.subr.mxu0 0.0
        %428 = vmatpush1.msra.mxu0 0.0
        %429 = vmatprep.mubr.f32.mxu0 0.0
        %430 = vmatmul.mubr.f32.gmra.mrb[0].mxu0 %v225
        %v431 = vpop.f32.mrb[0].mxu0
        %v432 = vadd.f32 %v337, %v431
        %v433 = vpop.f32.mrb[0].mxu0
        %434 = vmatprep.mubr.f32.mxu0 0.0
        %435 = vmatmul.mubr.f32.gmra.mrb[0].mxu0 %v226
        %v436 = vpop.f32.mrb[0].mxu0
        %v437 = vadd.f32 %v342, %v436
        %v438 = vpop.f32.mrb[0].mxu0
        %439 = vmatprep.mubr.f32.mxu0 0.0
        %440 = vmatmul.mubr.f32.gmra.mrb[0].mxu0 %v227
        %v441 = vpop.f32.mrb[0].mxu0
        %v442 = vadd.f32 %v347, %v441
        %v443 = vpop.f32.mrb[0].mxu0
        %444 = vmatprep.mubr.f32.mxu0 0.0
        %445 = vmatmul.mubr.f32.gmra.mrb[0].mxu0 %v228
        %v446 = vpop.f32.mrb[0].mxu0
        %v447 = vadd.f32 %v352, %v446
        %v448 = vpop.f32.mrb[0].mxu0
        %449 = vmatprep.mubr.f32.mxu0 0.0
        %450 = vmatmul.mubr.f32.gmra.mrb[0].mxu0 %v229
        %v451 = vpop.f32.mrb[0].mxu0
        %v452 = vadd.f32 %v357, %v451
        %v453 = vpop.f32.mrb[0].mxu0
        %454 = vmatprep.mubr.f32.mxu0 0.0
        %455 = vmatmul.mubr.f32.gmra.mrb[0].mxu0 %v230
        %v456 = vpop.f32.mrb[0].mxu0
        %v457 = vadd.f32 %v362, %v456
        %v458 = vpop.f32.mrb[0].mxu0
        %459 = vdwg.mxu0
        %v460 = vld [vmem:[#allocation2 + $0x2] sm:$0xff]
        %v461 = vld [vmem:[#allocation2 + $0xa] sm:$0xff]
        %v462 = vld [vmem:[#allocation2 + $0x1a] sm:$0xff]
        %v463 = vld [vmem:[#allocation2 + $0x22] sm:$0xff]
        %v464 = vld [vmem:[#allocation2 + $0x32] sm:$0xff]
        %v465 = vld [vmem:[#allocation2 + $0x3a] sm:$0xff]
        %s466 = scalar_lea.vmem [#allocation6], 256
        %v467 = vld [vmem:[%s466] sm:$0xff]
        %v468 = vld [vmem:[%s466 + $0x8] sm:$0xff]
        %v469 = vld [vmem:[%s466 + $0x10] sm:$0xff]
        %v470 = vld [vmem:[%s466 + $0x18] sm:$0xff]
        %v471 = vld [vmem:[%s466 + $0x20] sm:$0xff]
        %v472 = vld [vmem:[%s466 + $0x28] sm:$0xff]
        %v473 = vld [vmem:[%s466 + $0x30] sm:$0xff]
        %v474 = vld [vmem:[%s466 + $0x38] sm:$0xff]
        %v475 = vld [vmem:[%s466 + $0x40] sm:$0xff]
        %v476 = vld [vmem:[%s466 + $0x48] sm:$0xff]
        %v477 = vld [vmem:[%s466 + $0x50] sm:$0xff]
        %v478 = vld [vmem:[%s466 + $0x58] sm:$0xff]
        %v479 = vld [vmem:[%s466 + $0x60] sm:$0xff]
        %v480 = vld [vmem:[%s466 + $0x68] sm:$0xff]
        %v481 = vld [vmem:[%s466 + $0x70] sm:$0xff]
        %v482 = vld [vmem:[%s466 + $0x78] sm:$0xff]
        %483 = vmatprep.subr.mxu0 0.0
        %484 = vmatpush1.msra.mxu0 %v467
        %485 = vmatprep.subr.mxu0 0.0
        %486 = vmatpush1.msra.mxu0 %v468
        %487 = vmatprep.subr.mxu0 0.0
        %488 = vmatpush1.msra.mxu0 %v469
        %489 = vmatprep.subr.mxu0 0.0
        %490 = vmatpush1.msra.mxu0 %v470
        %491 = vmatprep.subr.mxu0 0.0
        %492 = vmatpush1.msra.mxu0 %v471
        %493 = vmatprep.subr.mxu0 0.0
        %494 = vmatpush1.msra.mxu0 %v472
        %495 = vmatprep.subr.mxu0 0.0
        %496 = vmatpush1.msra.mxu0 %v473
        %497 = vmatprep.subr.mxu0 0.0
        %498 = vmatpush1.msra.mxu0 %v474
        %499 = vmatprep.subr.mxu0 0.0
        %500 = vmatpush1.msra.mxu0 %v475
        %501 = vmatprep.subr.mxu0 0.0
        %502 = vmatpush1.msra.mxu0 %v476
        %503 = vmatprep.subr.mxu0 0.0
        %504 = vmatpush1.msra.mxu0 %v477
        %505 = vmatprep.subr.mxu0 0.0
        %506 = vmatpush1.msra.mxu0 %v478
        %507 = vmatprep.subr.mxu0 0.0
        %508 = vmatpush1.msra.mxu0 %v479
        %509 = vmatprep.subr.mxu0 0.0
        %510 = vmatpush1.msra.mxu0 %v480
        %511 = vmatprep.subr.mxu0 0.0
        %512 = vmatpush1.msra.mxu0 %v481
        %513 = vmatprep.subr.mxu0 0.0
        %514 = vmatpush1.msra.mxu0 %v482
        %515 = vmatprep.subr.mxu0 0.0
        %516 = vmatpush1.msra.mxu0 0.0
        %517 = vmatprep.subr.mxu0 0.0
        %518 = vmatpush1.msra.mxu0 0.0
        %519 = vmatprep.subr.mxu0 0.0
        %520 = vmatpush1.msra.mxu0 0.0
        %521 = vmatprep.subr.mxu0 0.0
        %522 = vmatpush1.msra.mxu0 0.0
        %523 = vmatprep.subr.mxu0 0.0
        %524 = vmatpush1.msra.mxu0 0.0
        %525 = vmatprep.subr.mxu0 0.0
        %526 = vmatpush1.msra.mxu0 0.0
        %527 = vmatprep.subr.mxu0 0.0
        %528 = vmatpush1.msra.mxu0 0.0
        %529 = vmatprep.subr.mxu0 0.0
        %530 = vmatpush1.msra.mxu0 0.0
        %531 = vmatprep.subr.mxu0 0.0
        %532 = vmatpush1.msra.mxu0 0.0
        %533 = vmatprep.subr.mxu0 0.0
        %534 = vmatpush1.msra.mxu0 0.0
        %535 = vmatprep.subr.mxu0 0.0
        %536 = vmatpush1.msra.mxu0 0.0
        %537 = vmatprep.subr.mxu0 0.0
        %538 = vmatpush1.msra.mxu0 0.0
        %539 = vmatprep.subr.mxu0 0.0
        %540 = vmatpush1.msra.mxu0 0.0
        %541 = vmatprep.subr.mxu0 0.0
        %542 = vmatpush1.msra.mxu0 0.0
        %543 = vmatprep.subr.mxu0 0.0
        %544 = vmatpush1.msra.mxu0 0.0
        %545 = vmatprep.subr.mxu0 0.0
        %546 = vmatpush1.msra.mxu0 0.0
        %547 = vmatprep.mubr.f32.mxu0 0.0
        %548 = vmatmul.mubr.f32.gmra.mrb[0].mxu0 %v460
        %v549 = vpop.f32.mrb[0].mxu0
        %v550 = vadd.f32 0.0, %v549
        %v551 = vpop.f32.mrb[0].mxu0
        %552 = vmatprep.mubr.f32.mxu0 0.0
        %553 = vmatmul.mubr.f32.gmra.mrb[0].mxu0 %v461
        %v554 = vpop.f32.mrb[0].mxu0
        %v555 = vadd.f32 0.0, %v554
        %v556 = vpop.f32.mrb[0].mxu0
        %557 = vmatprep.mubr.f32.mxu0 0.0
        %558 = vmatmul.mubr.f32.gmra.mrb[0].mxu0 %v462
        %v559 = vpop.f32.mrb[0].mxu0
        %v560 = vadd.f32 0.0, %v559
        %v561 = vpop.f32.mrb[0].mxu0
        %562 = vmatprep.mubr.f32.mxu0 0.0
        %563 = vmatmul.mubr.f32.gmra.mrb[0].mxu0 %v463
        %v564 = vpop.f32.mrb[0].mxu0
        %v565 = vadd.f32 0.0, %v564
        %v566 = vpop.f32.mrb[0].mxu0
        %567 = vmatprep.mubr.f32.mxu0 0.0
        %568 = vmatmul.mubr.f32.gmra.mrb[0].mxu0 %v464
        %v569 = vpop.f32.mrb[0].mxu0
        %v570 = vadd.f32 0.0, %v569
        %v571 = vpop.f32.mrb[0].mxu0
        %572 = vmatprep.mubr.f32.mxu0 0.0
        %573 = vmatmul.mubr.f32.gmra.mrb[0].mxu0 %v465
        %v574 = vpop.f32.mrb[0].mxu0
        %v575 = vadd.f32 0.0, %v574
        %v576 = vpop.f32.mrb[0].mxu0
        %577 = vdwg.mxu0
        %v578 = vadd.f32 %v432, %v550
        %v579 = vadd.f32 %v437, %v555
        %v580 = vadd.f32 %v442, %v560
        %v581 = vadd.f32 %v447, %v565
        %v582 = vadd.f32 %v452, %v570
        %v583 = vadd.f32 %v457, %v575
        %v584 = vld [vmem:[#allocation2 + $0x3] sm:$0xff]
        %v585 = vld [vmem:[#allocation2 + $0xb] sm:$0xff]
        %v586 = vld [vmem:[#allocation2 + $0x1b] sm:$0xff]
        %v587 = vld [vmem:[#allocation2 + $0x23] sm:$0xff]
        %v588 = vld [vmem:[#allocation2 + $0x33] sm:$0xff]
        %v589 = vld [vmem:[#allocation2 + $0x3b] sm:$0xff]
        %s590 = scalar_lea.vmem [#allocation6], 384
        %v591 = vld [vmem:[%s590] sm:$0xff]
        %v592 = vld [vmem:[%s590 + $0x8] sm:$0xff]
        %v593 = vld [vmem:[%s590 + $0x10] sm:$0xff]
        %v594 = vld [vmem:[%s590 + $0x18] sm:$0xff]
        %v595 = vld [vmem:[%s590 + $0x20] sm:$0xff]
        %v596 = vld [vmem:[%s590 + $0x28] sm:$0xff]
        %v597 = vld [vmem:[%s590 + $0x30] sm:$0xff]
        %v598 = vld [vmem:[%s590 + $0x38] sm:$0xff]
        %v599 = vld [vmem:[%s590 + $0x40] sm:$0xff]
        %v600 = vld [vmem:[%s590 + $0x48] sm:$0xff]
        %v601 = vld [vmem:[%s590 + $0x50] sm:$0xff]
        %v602 = vld [vmem:[%s590 + $0x58] sm:$0xff]
        %v603 = vld [vmem:[%s590 + $0x60] sm:$0xff]
        %v604 = vld [vmem:[%s590 + $0x68] sm:$0xff]
        %v605 = vld [vmem:[%s590 + $0x70] sm:$0xff]
        %v606 = vld [vmem:[%s590 + $0x78] sm:$0xff]
        %607 = vmatprep.subr.mxu0 0.0
        %608 = vmatpush1.msra.mxu0 %v591
        %609 = vmatprep.subr.mxu0 0.0
        %610 = vmatpush1.msra.mxu0 %v592
        %611 = vmatprep.subr.mxu0 0.0
        %612 = vmatpush1.msra.mxu0 %v593
        %613 = vmatprep.subr.mxu0 0.0
        %614 = vmatpush1.msra.mxu0 %v594
        %615 = vmatprep.subr.mxu0 0.0
        %616 = vmatpush1.msra.mxu0 %v595
        %617 = vmatprep.subr.mxu0 0.0
        %618 = vmatpush1.msra.mxu0 %v596
        %619 = vmatprep.subr.mxu0 0.0
        %620 = vmatpush1.msra.mxu0 %v597
        %621 = vmatprep.subr.mxu0 0.0
        %622 = vmatpush1.msra.mxu0 %v598
        %623 = vmatprep.subr.mxu0 0.0
        %624 = vmatpush1.msra.mxu0 %v599
        %625 = vmatprep.subr.mxu0 0.0
        %626 = vmatpush1.msra.mxu0 %v600
        %627 = vmatprep.subr.mxu0 0.0
        %628 = vmatpush1.msra.mxu0 %v601
        %629 = vmatprep.subr.mxu0 0.0
        %630 = vmatpush1.msra.mxu0 %v602
        %631 = vmatprep.subr.mxu0 0.0
        %632 = vmatpush1.msra.mxu0 %v603
        %633 = vmatprep.subr.mxu0 0.0
        %634 = vmatpush1.msra.mxu0 %v604
        %635 = vmatprep.subr.mxu0 0.0
        %636 = vmatpush1.msra.mxu0 %v605
        %637 = vmatprep.subr.mxu0 0.0
        %638 = vmatpush1.msra.mxu0 %v606
        %639 = vmatprep.subr.mxu0 0.0
        %640 = vmatpush1.msra.mxu0 0.0
        %641 = vmatprep.subr.mxu0 0.0
        %642 = vmatpush1.msra.mxu0 0.0
        %643 = vmatprep.subr.mxu0 0.0
        %644 = vmatpush1.msra.mxu0 0.0
        %645 = vmatprep.subr.mxu0 0.0
        %646 = vmatpush1.msra.mxu0 0.0
        %647 = vmatprep.subr.mxu0 0.0
        %648 = vmatpush1.msra.mxu0 0.0
        %649 = vmatprep.subr.mxu0 0.0
        %650 = vmatpush1.msra.mxu0 0.0
        %651 = vmatprep.subr.mxu0 0.0
        %652 = vmatpush1.msra.mxu0 0.0
        %653 = vmatprep.subr.mxu0 0.0
        %654 = vmatpush1.msra.mxu0 0.0
        %655 = vmatprep.subr.mxu0 0.0
        %656 = vmatpush1.msra.mxu0 0.0
        %657 = vmatprep.subr.mxu0 0.0
        %658 = vmatpush1.msra.mxu0 0.0
        %659 = vmatprep.subr.mxu0 0.0
        %660 = vmatpush1.msra.mxu0 0.0
        %661 = vmatprep.subr.mxu0 0.0
        %662 = vmatpush1.msra.mxu0 0.0
        %663 = vmatprep.subr.mxu0 0.0
        %664 = vmatpush1.msra.mxu0 0.0
        %665 = vmatprep.subr.mxu0 0.0
        %666 = vmatpush1.msra.mxu0 0.0
        %667 = vmatprep.subr.mxu0 0.0
        %668 = vmatpush1.msra.mxu0 0.0
        %669 = vmatprep.subr.mxu0 0.0
        %670 = vmatpush1.msra.mxu0 0.0
        %671 = vmatprep.mubr.f32.mxu0 0.0
        %672 = vmatmul.mubr.f32.gmra.mrb[0].mxu0 %v584
        %v673 = vpop.f32.mrb[0].mxu0
        %v674 = vadd.f32 0.0, %v673
        %v675 = vpop.f32.mrb[0].mxu0
        %676 = vmatprep.mubr.f32.mxu0 0.0
        %677 = vmatmul.mubr.f32.gmra.mrb[0].mxu0 %v585
        %v678 = vpop.f32.mrb[0].mxu0
        %v679 = vadd.f32 0.0, %v678
        %v680 = vpop.f32.mrb[0].mxu0
        %681 = vmatprep.mubr.f32.mxu0 0.0
        %682 = vmatmul.mubr.f32.gmra.mrb[0].mxu0 %v586
        %v683 = vpop.f32.mrb[0].mxu0
        %v684 = vadd.f32 0.0, %v683
        %v685 = vpop.f32.mrb[0].mxu0
        %686 = vmatprep.mubr.f32.mxu0 0.0
        %687 = vmatmul.mubr.f32.gmra.mrb[0].mxu0 %v587
        %v688 = vpop.f32.mrb[0].mxu0
        %v689 = vadd.f32 0.0, %v688
        %v690 = vpop.f32.mrb[0].mxu0
        %691 = vmatprep.mubr.f32.mxu0 0.0
        %692 = vmatmul.mubr.f32.gmra.mrb[0].mxu0 %v588
        %v693 = vpop.f32.mrb[0].mxu0
        %v694 = vadd.f32 0.0, %v693
        %v695 = vpop.f32.mrb[0].mxu0
        %696 = vmatprep.mubr.f32.mxu0 0.0
        %697 = vmatmul.mubr.f32.gmra.mrb[0].mxu0 %v589
        %v698 = vpop.f32.mrb[0].mxu0
        %v699 = vadd.f32 0.0, %v698
        %v700 = vpop.f32.mrb[0].mxu0
        %701 = vdwg.mxu0
        %v702 = vadd.f32 %v578, %v674
        %v703 = vadd.f32 %v579, %v679
        %v704 = vadd.f32 %v580, %v684
        %v705 = vadd.f32 %v581, %v689
        %v706 = vadd.f32 %v582, %v694
        %v707 = vadd.f32 %v583, %v699
        %v708 = vld [vmem:[#allocation2 + $0x4] sm:$0xff]
        %v709 = vld [vmem:[#allocation2 + $0xc] sm:$0xff]
        %v710 = vld [vmem:[#allocation2 + $0x1c] sm:$0xff]
        %v711 = vld [vmem:[#allocation2 + $0x24] sm:$0xff]
        %v712 = vld [vmem:[#allocation2 + $0x34] sm:$0xff]
        %v713 = vld [vmem:[#allocation2 + $0x3c] sm:$0xff]
        %s714 = scalar_lea.vmem [#allocation6], 512
        %v715 = vld [vmem:[%s714] sm:$0xff]
        %v716 = vld [vmem:[%s714 + $0x8] sm:$0xff]
        %v717 = vld [vmem:[%s714 + $0x10] sm:$0xff]
        %v718 = vld [vmem:[%s714 + $0x18] sm:$0xff]
        %v719 = vld [vmem:[%s714 + $0x20] sm:$0xff]
        %v720 = vld [vmem:[%s714 + $0x28] sm:$0xff]
        %v721 = vld [vmem:[%s714 + $0x30] sm:$0xff]
        %v722 = vld [vmem:[%s714 + $0x38] sm:$0xff]
        %v723 = vld [vmem:[%s714 + $0x40] sm:$0xff]
        %v724 = vld [vmem:[%s714 + $0x48] sm:$0xff]
        %v725 = vld [vmem:[%s714 + $0x50] sm:$0xff]
        %v726 = vld [vmem:[%s714 + $0x58] sm:$0xff]
        %v727 = vld [vmem:[%s714 + $0x60] sm:$0xff]
        %v728 = vld [vmem:[%s714 + $0x68] sm:$0xff]
        %v729 = vld [vmem:[%s714 + $0x70] sm:$0xff]
        %v730 = vld [vmem:[%s714 + $0x78] sm:$0xff]
        %731 = vmatprep.subr.mxu0 0.0
        %732 = vmatpush1.msra.mxu0 %v715
        %733 = vmatprep.subr.mxu0 0.0
        %734 = vmatpush1.msra.mxu0 %v716
        %735 = vmatprep.subr.mxu0 0.0
        %736 = vmatpush1.msra.mxu0 %v717
        %737 = vmatprep.subr.mxu0 0.0
        %738 = vmatpush1.msra.mxu0 %v718
        %739 = vmatprep.subr.mxu0 0.0
        %740 = vmatpush1.msra.mxu0 %v719
        %741 = vmatprep.subr.mxu0 0.0
        %742 = vmatpush1.msra.mxu0 %v720
        %743 = vmatprep.subr.mxu0 0.0
        %744 = vmatpush1.msra.mxu0 %v721
        %745 = vmatprep.subr.mxu0 0.0
        %746 = vmatpush1.msra.mxu0 %v722
        %747 = vmatprep.subr.mxu0 0.0
        %748 = vmatpush1.msra.mxu0 %v723
        %749 = vmatprep.subr.mxu0 0.0
        %750 = vmatpush1.msra.mxu0 %v724
        %751 = vmatprep.subr.mxu0 0.0
        %752 = vmatpush1.msra.mxu0 %v725
        %753 = vmatprep.subr.mxu0 0.0
        %754 = vmatpush1.msra.mxu0 %v726
        %755 = vmatprep.subr.mxu0 0.0
        %756 = vmatpush1.msra.mxu0 %v727
        %757 = vmatprep.subr.mxu0 0.0
        %758 = vmatpush1.msra.mxu0 %v728
        %759 = vmatprep.subr.mxu0 0.0
        %760 = vmatpush1.msra.mxu0 %v729
        %761 = vmatprep.subr.mxu0 0.0
        %762 = vmatpush1.msra.mxu0 %v730
        %763 = vmatprep.subr.mxu0 0.0
        %764 = vmatpush1.msra.mxu0 0.0
        %765 = vmatprep.subr.mxu0 0.0
        %766 = vmatpush1.msra.mxu0 0.0
        %767 = vmatprep.subr.mxu0 0.0
        %768 = vmatpush1.msra.mxu0 0.0
        %769 = vmatprep.subr.mxu0 0.0
        %770 = vmatpush1.msra.mxu0 0.0
        %771 = vmatprep.subr.mxu0 0.0
        %772 = vmatpush1.msra.mxu0 0.0
        %773 = vmatprep.subr.mxu0 0.0
        %774 = vmatpush1.msra.mxu0 0.0
        %775 = vmatprep.subr.mxu0 0.0
        %776 = vmatpush1.msra.mxu0 0.0
        %777 = vmatprep.subr.mxu0 0.0
        %778 = vmatpush1.msra.mxu0 0.0
        %779 = vmatprep.subr.mxu0 0.0
        %780 = vmatpush1.msra.mxu0 0.0
        %781 = vmatprep.subr.mxu0 0.0
        %782 = vmatpush1.msra.mxu0 0.0
        %783 = vmatprep.subr.mxu0 0.0
        %784 = vmatpush1.msra.mxu0 0.0
        %785 = vmatprep.subr.mxu0 0.0
        %786 = vmatpush1.msra.mxu0 0.0
        %787 = vmatprep.subr.mxu0 0.0
        %788 = vmatpush1.msra.mxu0 0.0
        %789 = vmatprep.subr.mxu0 0.0
        %790 = vmatpush1.msra.mxu0 0.0
        %791 = vmatprep.subr.mxu0 0.0
        %792 = vmatpush1.msra.mxu0 0.0
        %793 = vmatprep.subr.mxu0 0.0
        %794 = vmatpush1.msra.mxu0 0.0
        %795 = vmatprep.mubr.f32.mxu0 0.0
        %796 = vmatmul.mubr.f32.gmra.mrb[0].mxu0 %v708
        %v797 = vpop.f32.mrb[0].mxu0
        %v798 = vadd.f32 0.0, %v797
        %v799 = vpop.f32.mrb[0].mxu0
        %800 = vmatprep.mubr.f32.mxu0 0.0
        %801 = vmatmul.mubr.f32.gmra.mrb[0].mxu0 %v709
        %v802 = vpop.f32.mrb[0].mxu0
        %v803 = vadd.f32 0.0, %v802
        %v804 = vpop.f32.mrb[0].mxu0
        %805 = vmatprep.mubr.f32.mxu0 0.0
        %806 = vmatmul.mubr.f32.gmra.mrb[0].mxu0 %v710
        %v807 = vpop.f32.mrb[0].mxu0
        %v808 = vadd.f32 0.0, %v807
        %v809 = vpop.f32.mrb[0].mxu0
        %810 = vmatprep.mubr.f32.mxu0 0.0
        %811 = vmatmul.mubr.f32.gmra.mrb[0].mxu0 %v711
        %v812 = vpop.f32.mrb[0].mxu0
        %v813 = vadd.f32 0.0, %v812
        %v814 = vpop.f32.mrb[0].mxu0
        %815 = vmatprep.mubr.f32.mxu0 0.0
        %816 = vmatmul.mubr.f32.gmra.mrb[0].mxu0 %v712
        %v817 = vpop.f32.mrb[0].mxu0
        %v818 = vadd.f32 0.0, %v817
        %v819 = vpop.f32.mrb[0].mxu0
        %820 = vmatprep.mubr.f32.mxu0 0.0
        %821 = vmatmul.mubr.f32.gmra.mrb[0].mxu0 %v713
        %v822 = vpop.f32.mrb[0].mxu0
        %v823 = vadd.f32 0.0, %v822
        %v824 = vpop.f32.mrb[0].mxu0
        %825 = vdwg.mxu0
        %v826 = vadd.f32 %v702, %v798
        %v827 = vadd.f32 %v703, %v803
        %v828 = vadd.f32 %v704, %v808
        %v829 = vadd.f32 %v705, %v813
        %v830 = vadd.f32 %v706, %v818
        %v831 = vadd.f32 %v707, %v823
        %v832 = vld [vmem:[#allocation2 + $0x5] sm:$0xff]
        %v833 = vld [vmem:[#allocation2 + $0xd] sm:$0xff]
        %v834 = vld [vmem:[#allocation2 + $0x1d] sm:$0xff]
        %v835 = vld [vmem:[#allocation2 + $0x25] sm:$0xff]
        %v836 = vld [vmem:[#allocation2 + $0x35] sm:$0xff]
        %v837 = vld [vmem:[#allocation2 + $0x3d] sm:$0xff]
        %s838 = scalar_lea.vmem [#allocation6], 640
        %v839 = vld [vmem:[%s838] sm:$0xff]
        %v840 = vld [vmem:[%s838 + $0x8] sm:$0xff]
        %v841 = vld [vmem:[%s838 + $0x10] sm:$0xff]
        %v842 = vld [vmem:[%s838 + $0x18] sm:$0xff]
        %v843 = vld [vmem:[%s838 + $0x20] sm:$0xff]
        %v844 = vld [vmem:[%s838 + $0x28] sm:$0xff]
        %v845 = vld [vmem:[%s838 + $0x30] sm:$0xff]
        %v846 = vld [vmem:[%s838 + $0x38] sm:$0xff]
        %v847 = vld [vmem:[%s838 + $0x40] sm:$0xff]
        %v848 = vld [vmem:[%s838 + $0x48] sm:$0xff]
        %v849 = vld [vmem:[%s838 + $0x50] sm:$0xff]
        %v850 = vld [vmem:[%s838 + $0x58] sm:$0xff]
        %v851 = vld [vmem:[%s838 + $0x60] sm:$0xff]
        %v852 = vld [vmem:[%s838 + $0x68] sm:$0xff]
        %v853 = vld [vmem:[%s838 + $0x70] sm:$0xff]
        %v854 = vld [vmem:[%s838 + $0x78] sm:$0xff]
        %855 = vmatprep.subr.mxu0 0.0
        %856 = vmatpush1.msra.mxu0 %v839
        %857 = vmatprep.subr.mxu0 0.0
        %858 = vmatpush1.msra.mxu0 %v840
        %859 = vmatprep.subr.mxu0 0.0
        %860 = vmatpush1.msra.mxu0 %v841
        %861 = vmatprep.subr.mxu0 0.0
        %862 = vmatpush1.msra.mxu0 %v842
        %863 = vmatprep.subr.mxu0 0.0
        %864 = vmatpush1.msra.mxu0 %v843
        %865 = vmatprep.subr.mxu0 0.0
        %866 = vmatpush1.msra.mxu0 %v844
        %867 = vmatprep.subr.mxu0 0.0
        %868 = vmatpush1.msra.mxu0 %v845
        %869 = vmatprep.subr.mxu0 0.0
        %870 = vmatpush1.msra.mxu0 %v846
        %871 = vmatprep.subr.mxu0 0.0
        %872 = vmatpush1.msra.mxu0 %v847
        %873 = vmatprep.subr.mxu0 0.0
        %874 = vmatpush1.msra.mxu0 %v848
        %875 = vmatprep.subr.mxu0 0.0
        %876 = vmatpush1.msra.mxu0 %v849
        %877 = vmatprep.subr.mxu0 0.0
        %878 = vmatpush1.msra.mxu0 %v850
        %879 = vmatprep.subr.mxu0 0.0
        %880 = vmatpush1.msra.mxu0 %v851
        %881 = vmatprep.subr.mxu0 0.0
        %882 = vmatpush1.msra.mxu0 %v852
        %883 = vmatprep.subr.mxu0 0.0
        %884 = vmatpush1.msra.mxu0 %v853
        %885 = vmatprep.subr.mxu0 0.0
        %886 = vmatpush1.msra.mxu0 %v854
        %887 = vmatprep.subr.mxu0 0.0
        %888 = vmatpush1.msra.mxu0 0.0
        %889 = vmatprep.subr.mxu0 0.0
        %890 = vmatpush1.msra.mxu0 0.0
        %891 = vmatprep.subr.mxu0 0.0
        %892 = vmatpush1.msra.mxu0 0.0
        %893 = vmatprep.subr.mxu0 0.0
        %894 = vmatpush1.msra.mxu0 0.0
        %895 = vmatprep.subr.mxu0 0.0
        %896 = vmatpush1.msra.mxu0 0.0
        %897 = vmatprep.subr.mxu0 0.0
        %898 = vmatpush1.msra.mxu0 0.0
        %899 = vmatprep.subr.mxu0 0.0
        %900 = vmatpush1.msra.mxu0 0.0
        %901 = vmatprep.subr.mxu0 0.0
        %902 = vmatpush1.msra.mxu0 0.0
        %903 = vmatprep.subr.mxu0 0.0
        %904 = vmatpush1.msra.mxu0 0.0
        %905 = vmatprep.subr.mxu0 0.0
        %906 = vmatpush1.msra.mxu0 0.0
        %907 = vmatprep.subr.mxu0 0.0
        %908 = vmatpush1.msra.mxu0 0.0
        %909 = vmatprep.subr.mxu0 0.0
        %910 = vmatpush1.msra.mxu0 0.0
        %911 = vmatprep.subr.mxu0 0.0
        %912 = vmatpush1.msra.mxu0 0.0
        %913 = vmatprep.subr.mxu0 0.0
        %914 = vmatpush1.msra.mxu0 0.0
        %915 = vmatprep.subr.mxu0 0.0
        %916 = vmatpush1.msra.mxu0 0.0
        %917 = vmatprep.subr.mxu0 0.0
        %918 = vmatpush1.msra.mxu0 0.0
        %919 = vmatprep.mubr.f32.mxu0 0.0
        %920 = vmatmul.mubr.f32.gmra.mrb[0].mxu0 %v832
        %v921 = vpop.f32.mrb[0].mxu0
        %v922 = vadd.f32 0.0, %v921
        %v923 = vpop.f32.mrb[0].mxu0
        %924 = vmatprep.mubr.f32.mxu0 0.0
        %925 = vmatmul.mubr.f32.gmra.mrb[0].mxu0 %v833
        %v926 = vpop.f32.mrb[0].mxu0
        %v927 = vadd.f32 0.0, %v926
        %v928 = vpop.f32.mrb[0].mxu0
        %929 = vmatprep.mubr.f32.mxu0 0.0
        %930 = vmatmul.mubr.f32.gmra.mrb[0].mxu0 %v834
        %v931 = vpop.f32.mrb[0].mxu0
        %v932 = vadd.f32 0.0, %v931
        %v933 = vpop.f32.mrb[0].mxu0
        %934 = vmatprep.mubr.f32.mxu0 0.0
        %935 = vmatmul.mubr.f32.gmra.mrb[0].mxu0 %v835
        %v936 = vpop.f32.mrb[0].mxu0
        %v937 = vadd.f32 0.0, %v936
        %v938 = vpop.f32.mrb[0].mxu0
        %939 = vmatprep.mubr.f32.mxu0 0.0
        %940 = vmatmul.mubr.f32.gmra.mrb[0].mxu0 %v836
        %v941 = vpop.f32.mrb[0].mxu0
        %v942 = vadd.f32 0.0, %v941
        %v943 = vpop.f32.mrb[0].mxu0
        %944 = vmatprep.mubr.f32.mxu0 0.0
        %945 = vmatmul.mubr.f32.gmra.mrb[0].mxu0 %v837
        %v946 = vpop.f32.mrb[0].mxu0
        %v947 = vadd.f32 0.0, %v946
        %v948 = vpop.f32.mrb[0].mxu0
        %949 = vdwg.mxu0
        %v950 = vadd.f32 %v826, %v922
        %v951 = vadd.f32 %v827, %v927
        %v952 = vadd.f32 %v828, %v932
        %v953 = vadd.f32 %v829, %v937
        %v954 = vadd.f32 %v830, %v942
        %v955 = vadd.f32 %v831, %v947
        %v956 = vld [vmem:[%s2] sm:$0x1]
        %v958 = vlaneseq
        %v959 = vshrl.u32 %v958, 7
        %v960 = vsub.s32 0, %v959
        %v961 = vrot.slane %v956, %v960
        %v963 = vadd.f32 %v950, %v961
        %v964 = vadd.f32 %v951, %v961
        %v965 = vadd.f32 %v952, %v961
        %v966 = vadd.f32 %v953, %v961
        %v967 = vadd.f32 %v954, %v961
        %v968 = vadd.f32 %v955, %v961
        %v969 = vmax.f32 %v963, 0.0
        %v970 = vmax.f32 %v964, 0.0
        %v971 = vmax.f32 %v965, 0.0
        %v972 = vmax.f32 %v966, 0.0
        %v973 = vmax.f32 %v967, 0.0
        %v974 = vmax.f32 %v968, 0.0
        %v975 = vadd.f32 %v969, %v207
        %v976 = vadd.f32 %v970, %v208
        %v977 = vadd.f32 %v971, %v209
        %v978 = vadd.f32 %v972, %v210
        %v979 = vadd.f32 %v973, %v211
        %v980 = vadd.f32 %v974, %v212
        %981 = vst [vmem:[%s204] sm:$0xff] %v975
        %982 = vst [vmem:[%s204 + $0x8] sm:$0xff] %v976
        %983 = vst [vmem:[%s204 + $0x10] sm:$0xff] %v977
        %984 = vst [vmem:[%s204 + $0x18] sm:$0xff] %v978
        %985 = vst [vmem:[%s204 + $0x20] sm:$0xff] %v979
        %986 = vst [vmem:[%s204 + $0x28] sm:$0xff] %v980
        %s987 = sand.u32 %s97, 1
        %s988 = scalar_lea.sflag [#allocation5], %s987
        %s989 = sand.u32 %s97, 1
        %s990 = smul.addr %s989, 48
        %s991 = scalar_lea.vmem [#allocation8], %s990
        // Predicated region
        $region41: #{tpu_custom_call.1} parent=31 // pred_check
          %p992 = pneg %p107
        $region42: #{tpu_custom_call.1} parent=31 // pred_check_branch
          %994 = sbr.rel (%p992) target = $region44
        $region43: #{tpu_custom_call.1} parent=31 // pred_region
          %s995 = smul.u32 3, %s21
          %s997 = ssub.s32 768, 768
          %998 = vsyncadd %s988, %s997
          %s999 = smul.addr %s995, 2
          %s1000 = smul.addr %s999, 128
          %s1001 = scalar_lea.hbm %s3, %s1000
          %s1002 = sshll.u32 %s991, 4
          %s1003 = int_to_ptr.vmem [resolvable:$true] %s1002
          %1008 = dma.vmem_to_hbm [thread:$0]  %s1003, 768, %s1001, %s988, 128, 128, 8
        $region44: #{tpu_custom_call.1} parent=31 // pred_fallthru
          _
      $region32: #{tpu_custom_call.1} parent=5 // pred_fallthru
        _
      %p1009 = scmp.le.s32.totalorder 2, %s16
      // Predicated region
      $region45: #{tpu_custom_call.1} parent=5 // pred_check
        %p1010 = pneg %p1009
      $region46: #{tpu_custom_call.1} parent=5 // pred_check_branch
        %1012 = sbr.rel (%p1010) target = $region48
      $region47: #{tpu_custom_call.1} parent=5 // pred_region
        %s1013 = ssub.s32 %s16, 2
        // Predicated region
        $region49: #{tpu_custom_call.1} parent=47 // pred_check
          %p1014 = pneg %p113
        $region50: #{tpu_custom_call.1} parent=47 // pred_check_branch
          %1016 = sbr.rel (%p1014) target = $region52
        $region51: #{tpu_custom_call.1} parent=47 // pred_region
          %s1017 = sand.u32 %s98, 1
          %s1018 = scalar_lea.sflag [#allocation5], %s1017
          %s1019 = sand.u32 %s98, 1
          %s1020 = smul.addr %s1019, 48
          %s1021 = scalar_lea.vmem [#allocation8], %s1020
          %1022 = dma.done %s1018, 768
        $region52: #{tpu_custom_call.1} parent=47 // pred_fallthru
          _
      $region48: #{tpu_custom_call.1} parent=5 // pred_fallthru
        _
    $region6: #{tpu_custom_call.1} parent=1 // loop_footer
      %s20 = sadd.s32 1, %s16
    $region7: #{tpu_custom_call.1} parent=1 // loop_footer_branch
      %15 = sbr.rel target = $region3
    $region8: #{tpu_custom_call.1} parent=1 // loop_exit
      _
    %1023 = vsyncpa [#allocation4], 1
    %s1024 = scalar_lea.sflag [#allocation4], 1
    %1025 = vsyncpa %s1024, 1
    %1026 = vsyncpa [#allocation7], 1
    %1027 = vsyncpa [#allocation5], 1
    %s1028 = scalar_lea.sflag [#allocation5], 1
    %1029 = vsyncpa %s1028, 1

</llo_original>
